<compile_context>
chip_gen: v7x
topology: tpu7x:2x2x1
jax: 0.10.0
libtpu: 0.0.40
codegen_flags: <defaults>
</compile_context>

<pallas_src>
import functools

import jax
import jax.numpy as jnp
import numpy as np
from jax import lax
from jax.experimental import pallas as pl
from jax.experimental.pallas import tpu as pltpu


def _local_moran_kernel(y_full_ref, y_tile_ref, w_ref, ids_ref, vlen_ref,
                        out_ref, *, n_true):
    """One node-tile of the Local Moran computation.

    y_full_ref : (1, N_pad) f32   full y row, resident for every tile
    y_tile_ref : (1, T)     f32   y values of this tile's nodes (lane-dense)
    w_ref      : (K, T)     f32   padded neighbor weights, nodes on lanes
    ids_ref    : (K, T)     i32   padded neighbor ids,     nodes on lanes
    vlen_ref   : (1, T)     f32   valid neighbor count (0 for padded nodes)
    out_ref    : (1, T)     f32   |I| per node (0 for padded nodes)
    """
    n_pad = y_full_ref.shape[1]
    k_max, tile = w_ref.shape

    y_full = y_full_ref[...]                                   # (1, N_pad)
    # Padded y entries are zero, so dividing the sum by the true N gives the
    # exact mean of the original vector.
    y_mean = jnp.sum(y_full) / jnp.float32(n_true)

    # ---- scatter matrix A[m, n] = sum_k w[k, n] * (ids[k, n] == m) ----------
    # K cheap VPU compare/select/add passes; no cross-lane reductions here.
    # The neighbor-sum reduction itself is done on the MXU below.
    iota_m = lax.broadcasted_iota(jnp.int32, (n_pad, tile), 0)
    a = jnp.zeros((n_pad, tile), jnp.float32)
    for k in range(k_max):                    # K = max degree, tiny & static
        ids_k = ids_ref[k:k + 1, :]           # (1, T) int32
        w_k = w_ref[k:k + 1, :]               # (1, T) f32
        a = a + jnp.where(ids_k == iota_m, w_k, 0.0)

    # ---- neighbor moments via MXU matmuls (f32 accumulation) ----------------
    z_row = y_full - y_mean                                    # (1, N_pad)
    wz = jnp.dot(z_row, a, preferred_element_type=jnp.float32)          # (1,T)
    wz2 = jnp.dot(z_row * z_row, a, preferred_element_type=jnp.float32)  # (1,T)

    # ---- lane-dense per-node epilogue ---------------------------------------
    vlen = vlen_ref[...]                                       # (1, T)
    s2 = wz2 * pl.reciprocal(vlen - 1.0, approx=False)
    i_val = (y_tile_ref[...] - y_mean) * wz * pl.reciprocal(s2, approx=False)
    # Padded nodes (vlen == 0) produce 0/0 -> NaN; the select masks them out.
    out_ref[...] = jnp.where(vlen > 0.5, jnp.abs(i_val), 0.0)


def local_moran_index(y, weights_pad, ids_pad, valid_len):
    """mean(|Local Moran I|).

    y:           (N,)   float
    weights_pad: (N, K) float  zero-padded neighbor weights (pad_sequence.T)
    ids_pad:     (N, K) int    zero-padded neighbor ids
    valid_len:   (N,)   number of real neighbors per node
    """
    n = int(y.shape[0])
    k = int(weights_pad.shape[1])

    # Lane tiling of the node axis: block must be == full dim or % 128 == 0.
    if n <= 512:
        tile = n
        n_pad = n
    else:
        tile = 512
        n_pad = ((n + tile - 1) // tile) * tile
    num_tiles = n_pad // tile
    pad = n_pad - n

    y_row = jnp.pad(y.astype(jnp.float32), (0, pad)).reshape(1, n_pad)
    w_t = jnp.pad(weights_pad.astype(jnp.float32), ((0, pad), (0, 0))).T  # (K,N_pad)
    ids_t = jnp.pad(ids_pad.astype(jnp.int32), ((0, pad), (0, 0))).T      # (K,N_pad)
    vlen_row = jnp.pad(valid_len.astype(jnp.float32), (0, pad)).reshape(1, n_pad)

    # Explicit VMEM budget: double-buffered blocks + the (N_pad, TILE) scatter
    # matrix / iota / mask temporaries, with margin; clamped for v5e..v7x.
    est = 4 * (2 * n_pad + (4 * k + 6) * tile) + 16 * n_pad * tile
    vmem_limit = int(min(max(2 * est, 8 * 2 ** 20), 64 * 2 ** 20))

    kernel = functools.partial(_local_moran_kernel, n_true=n)
    abs_i = pl.pallas_call(
        kernel,
        out_shape=jax.ShapeDtypeStruct((1, n_pad), jnp.float32),
        grid_spec=pltpu.PrefetchScalarGridSpec(
            num_scalar_prefetch=0,
            grid=(num_tiles,),
            in_specs=[
                pl.BlockSpec((1, n_pad), lambda i: (0, 0)),  # full y row (resident)
                pl.BlockSpec((1, tile), lambda i: (0, i)),   # this tile's y values
                pl.BlockSpec((k, tile), lambda i: (0, i)),   # weights (K, T)
                pl.BlockSpec((k, tile), lambda i: (0, i)),   # ids     (K, T)
                pl.BlockSpec((1, tile), lambda i: (0, i)),   # valid_len
            ],
            out_specs=pl.BlockSpec((1, tile), lambda i: (0, i)),
        ),
        compiler_params=pltpu.CompilerParams(
            dimension_semantics=("parallel",),
            vmem_limit_bytes=vmem_limit,
        ),
    )(y_row, y_row, w_t, ids_t, vlen_row)

    # Final tiny reduction (mean of |I| over the N real nodes) in plain JAX;
    # padded lanes are already zeroed inside the kernel.
    return jnp.sum(abs_i) / jnp.float32(n)


if __name__ == "__main__":
    N = 16
    key = jax.random.PRNGKey(0)
    y = jax.random.normal(key, (N,), dtype=jnp.float32)

    # Deterministic ragged neighbor structure (2..4 neighbors per node,
    # row-normalized weights), then pad_sequence-style dense zero padding.
    neighbor_ids, neighbor_weights = [], []
    for i in range(N):
        deg = 2 + (i % 3)
        neighbor_ids.append([(i + d + 1) % N for d in range(deg)])
        neighbor_weights.append([1.0 / deg] * deg)

    K = max(len(r) for r in neighbor_ids)
    ids_pad = np.zeros((N, K), np.int32)
    w_pad = np.zeros((N, K), np.float32)
    vlen = np.zeros((N,), np.float32)
    for i in range(N):
        L = len(neighbor_ids[i])
        ids_pad[i, :L] = neighbor_ids[i]
        w_pad[i, :L] = neighbor_weights[i]
        vlen[i] = L

    out = local_moran_index(
        y, jnp.asarray(w_pad), jnp.asarray(ids_pad), jnp.asarray(vlen))
    out = jax.block_until_ready(out)

    # NumPy reference (identical to the PyTorch forward pass).
    y_np = np.asarray(y)
    y_mean = y_np.mean()
    Z = y_np[ids_pad] - y_mean
    S2 = (w_pad * Z ** 2).sum(1) / (vlen - 1)
    I = (y_np - y_mean) * (w_pad * Z).sum(1) / S2
    ref = np.abs(I).mean()

    assert np.allclose(np.asarray(out), ref, rtol=1e-5, atol=1e-5), (out, ref)
    print("KERNEL_OK")
</pallas_src>

<mosaic_0001>
module attributes {stable_mosaic.version = 11 : i64} {
  func.func @_local_moran_kernel(%arg0: i32, %arg1: memref<1x16xf32, #tpu.memory_space<vmem>>, %arg2: memref<1x16xf32, #tpu.memory_space<vmem>>, %arg3: memref<4x16xf32, #tpu.memory_space<vmem>>, %arg4: memref<4x16xi32, #tpu.memory_space<vmem>>, %arg5: memref<1x16xf32, #tpu.memory_space<vmem>>, %arg6: memref<1x16xf32, #tpu.memory_space<vmem>>) attributes {dimension_semantics = [#tpu.dimension_semantics<parallel>], iteration_bounds = array<i64: 1>, scalar_prefetch = 0 : i64, scratch_operands = 0 : i64, tpu.core_type = #tpu.core_type<tc>, window_params = [{pipeline_mode = #tpu.pipeline_mode<synchronous>, transform_indices = @transform_0, window_bounds = array<i64: 1, 16>}, {transform_indices = @transform_1, window_bounds = array<i64: 1, 16>}, {transform_indices = @transform_2, window_bounds = array<i64: 4, 16>}, {transform_indices = @transform_3, window_bounds = array<i64: 4, 16>}, {transform_indices = @transform_4, window_bounds = array<i64: 1, 16>}, {transform_indices = @transform_5, window_bounds = array<i64: 1, 16>}]} {
    %c0 = arith.constant 0 : index
    %c0_0 = arith.constant 0 : index
    %0 = vector.load %arg1[%c0, %c0_0] : memref<1x16xf32, #tpu.memory_space<vmem>>, vector<1x16xf32>
    %1 = vector.shape_cast %0 : vector<1x16xf32> to vector<1x1x16xf32>
    %cst = arith.constant dense<0.000000e+00> : vector<1xf32>
    %2 = vector.multi_reduction <add>, %1, %cst [1, 2] : vector<1x1x16xf32> to vector<1xf32>
    %3 = vector.shape_cast %2 : vector<1xf32> to vector<1x1x1xf32>
    %4 = vector.extract %3[0, 0, 0] : f32 from vector<1x1x1xf32>
    %cst_1 = arith.constant 1.600000e+01 : f32
    %5 = arith.divf %4, %cst_1 : f32
    %6 = tpu.iota {dimensions = array<i32: 0>} : vector<16x16xi32>
    %cst_2 = arith.constant 0.000000e+00 : f32
    %7 = vector.broadcast %cst_2 : f32 to vector<16x16xf32>
    %c0_3 = arith.constant 0 : index
    %c0_4 = arith.constant 0 : index
    %8 = vector.load %arg4[%c0_3, %c0_4] : memref<4x16xi32, #tpu.memory_space<vmem>>, vector<1x16xi32>
    %c0_5 = arith.constant 0 : index
    %c0_6 = arith.constant 0 : index
    %9 = vector.load %arg3[%c0_5, %c0_6] : memref<4x16xf32, #tpu.memory_space<vmem>>, vector<1x16xf32>
    %10 = vector.broadcast %8 : vector<1x16xi32> to vector<16x16xi32>
    %11 = arith.cmpi eq, %10, %6 : vector<16x16xi32>
    %cst_7 = arith.constant 0.000000e+00 : f32
    %12 = vector.shape_cast %9 : vector<1x16xf32> to vector<1x16xf32>
    %13 = vector.broadcast %12 : vector<1x16xf32> to vector<16x16xf32>
    %14 = vector.broadcast %cst_7 : f32 to vector<16x16xf32>
    %15 = arith.select %11, %13, %14 : vector<16x16xi1>, vector<16x16xf32>
    %16 = arith.addf %7, %15 : vector<16x16xf32>
    %c1 = arith.constant 1 : index
    %c0_8 = arith.constant 0 : index
    %17 = vector.load %arg4[%c1, %c0_8] : memref<4x16xi32, #tpu.memory_space<vmem>>, vector<1x16xi32>
    %c1_9 = arith.constant 1 : index
    %c0_10 = arith.constant 0 : index
    %18 = vector.load %arg3[%c1_9, %c0_10] : memref<4x16xf32, #tpu.memory_space<vmem>>, vector<1x16xf32>
    %19 = vector.broadcast %17 : vector<1x16xi32> to vector<16x16xi32>
    %20 = arith.cmpi eq, %19, %6 : vector<16x16xi32>
    %cst_11 = arith.constant 0.000000e+00 : f32
    %21 = vector.shape_cast %18 : vector<1x16xf32> to vector<1x16xf32>
    %22 = vector.broadcast %21 : vector<1x16xf32> to vector<16x16xf32>
    %23 = vector.broadcast %cst_11 : f32 to vector<16x16xf32>
    %24 = arith.select %20, %22, %23 : vector<16x16xi1>, vector<16x16xf32>
    %25 = arith.addf %16, %24 : vector<16x16xf32>
    %c2 = arith.constant 2 : index
    %c0_12 = arith.constant 0 : index
    %26 = vector.load %arg4[%c2, %c0_12] : memref<4x16xi32, #tpu.memory_space<vmem>>, vector<1x16xi32>
    %c2_13 = arith.constant 2 : index
    %c0_14 = arith.constant 0 : index
    %27 = vector.load %arg3[%c2_13, %c0_14] : memref<4x16xf32, #tpu.memory_space<vmem>>, vector<1x16xf32>
    %28 = vector.broadcast %26 : vector<1x16xi32> to vector<16x16xi32>
    %29 = arith.cmpi eq, %28, %6 : vector<16x16xi32>
    %cst_15 = arith.constant 0.000000e+00 : f32
    %30 = vector.shape_cast %27 : vector<1x16xf32> to vector<1x16xf32>
    %31 = vector.broadcast %30 : vector<1x16xf32> to vector<16x16xf32>
    %32 = vector.broadcast %cst_15 : f32 to vector<16x16xf32>
    %33 = arith.select %29, %31, %32 : vector<16x16xi1>, vector<16x16xf32>
    %34 = arith.addf %25, %33 : vector<16x16xf32>
    %c3 = arith.constant 3 : index
    %c0_16 = arith.constant 0 : index
    %35 = vector.load %arg4[%c3, %c0_16] : memref<4x16xi32, #tpu.memory_space<vmem>>, vector<1x16xi32>
    %c3_17 = arith.constant 3 : index
    %c0_18 = arith.constant 0 : index
    %36 = vector.load %arg3[%c3_17, %c0_18] : memref<4x16xf32, #tpu.memory_space<vmem>>, vector<1x16xf32>
    %37 = vector.broadcast %35 : vector<1x16xi32> to vector<16x16xi32>
    %38 = arith.cmpi eq, %37, %6 : vector<16x16xi32>
    %cst_19 = arith.constant 0.000000e+00 : f32
    %39 = vector.shape_cast %36 : vector<1x16xf32> to vector<1x16xf32>
    %40 = vector.broadcast %39 : vector<1x16xf32> to vector<16x16xf32>
    %41 = vector.broadcast %cst_19 : f32 to vector<16x16xf32>
    %42 = arith.select %38, %40, %41 : vector<16x16xi1>, vector<16x16xf32>
    %43 = arith.addf %34, %42 : vector<16x16xf32>
    %44 = vector.broadcast %5 : f32 to vector<1x16xf32>
    %45 = arith.subf %0, %44 : vector<1x16xf32>
    %cst_20 = arith.constant dense<0.000000e+00> : vector<1x16xf32>
    %46 = tpu.matmul %45, %43, %cst_20 {dimension_numbers = #tpu.dot_dimension_numbers<[1], [0], [0], [1], [0, 0, 1, 1], [], []>} : vector<1x16xf32>, vector<16x16xf32>, vector<1x16xf32> -> vector<1x16xf32>
    %47 = arith.mulf %45, %45 : vector<1x16xf32>
    %cst_21 = arith.constant dense<0.000000e+00> : vector<1x16xf32>
    %48 = tpu.matmul %47, %43, %cst_21 {dimension_numbers = #tpu.dot_dimension_numbers<[1], [0], [0], [1], [0, 0, 1, 1], [], []>} : vector<1x16xf32>, vector<16x16xf32>, vector<1x16xf32> -> vector<1x16xf32>
    %c0_22 = arith.constant 0 : index
    %c0_23 = arith.constant 0 : index
    %49 = vector.load %arg5[%c0_22, %c0_23] : memref<1x16xf32, #tpu.memory_space<vmem>>, vector<1x16xf32>
    %cst_24 = arith.constant 1.000000e+00 : f32
    %50 = vector.broadcast %cst_24 : f32 to vector<1x16xf32>
    %51 = arith.subf %49, %50 : vector<1x16xf32>
    %52 = tpu.reciprocal %51 : vector<1x16xf32> -> vector<1x16xf32>
    %53 = arith.mulf %48, %52 : vector<1x16xf32>
    %c0_25 = arith.constant 0 : index
    %c0_26 = arith.constant 0 : index
    %54 = vector.load %arg2[%c0_25, %c0_26] : memref<1x16xf32, #tpu.memory_space<vmem>>, vector<1x16xf32>
    %55 = vector.broadcast %5 : f32 to vector<1x16xf32>
    %56 = arith.subf %54, %55 : vector<1x16xf32>
    %57 = arith.mulf %56, %46 : vector<1x16xf32>
    %58 = tpu.reciprocal %53 : vector<1x16xf32> -> vector<1x16xf32>
    %59 = arith.mulf %57, %58 : vector<1x16xf32>
    %cst_27 = arith.constant 5.000000e-01 : f32
    %60 = vector.broadcast %cst_27 : f32 to vector<1x16xf32>
    %61 = arith.cmpf ogt, %49, %60 : vector<1x16xf32>
    %62 = math.absf %59 : vector<1x16xf32>
    %cst_28 = arith.constant 0.000000e+00 : f32
    %63 = vector.broadcast %cst_28 : f32 to vector<1x16xf32>
    %64 = arith.select %61, %62, %63 : vector<1x16xi1>, vector<1x16xf32>
    %c0_29 = arith.constant 0 : index
    %c0_30 = arith.constant 0 : index
    %65 = vector.load %arg6[%c0_29, %c0_30] : memref<1x16xf32, #tpu.memory_space<vmem>>, vector<1x16xf32>
    tpu.vector_store %arg6[%c0_29, %c0_30], %64 {strides = array<i32>} : memref<1x16xf32, #tpu.memory_space<vmem>>, vector<1x16xf32>,
    return
  }
  func.func @transform_0(%arg0: i32) -> (i32, i32) {
    %c0_i32 = arith.constant 0 : i32
    %c0_i32_0 = arith.constant 0 : i32
    %c0_i32_1 = arith.constant 0 : i32
    return %c0_i32, %c0_i32_0 : i32, i32
  }
  func.func @transform_1(%arg0: i32) -> (i32, i32) {
    %c0_i32 = arith.constant 0 : i32
    %c0_i32_0 = arith.constant 0 : i32
    return %c0_i32, %arg0 : i32, i32
  }
  func.func @transform_2(%arg0: i32) -> (i32, i32) {
    %c0_i32 = arith.constant 0 : i32
    %c0_i32_0 = arith.constant 0 : i32
    return %c0_i32, %arg0 : i32, i32
  }
  func.func @transform_3(%arg0: i32) -> (i32, i32) {
    %c0_i32 = arith.constant 0 : i32
    %c0_i32_0 = arith.constant 0 : i32
    return %c0_i32, %arg0 : i32, i32
  }
  func.func @transform_4(%arg0: i32) -> (i32, i32) {
    %c0_i32 = arith.constant 0 : i32
    %c0_i32_0 = arith.constant 0 : i32
    return %c0_i32, %arg0 : i32, i32
  }
  func.func @transform_5(%arg0: i32) -> (i32, i32) {
    %c0_i32 = arith.constant 0 : i32
    %c0_i32_0 = arith.constant 0 : i32
    return %c0_i32, %arg0 : i32, i32
  }
}

</mosaic_0001>

<llo_original>
// kernel: tpu_custom_call.1
$region0: #{tpu_custom_call.1}
  #allocation0 [shape = 'u32[]', space=smem, size = 0x4, offset = 0x4, fixed_abs, tag = 'smem constant byte address 0x4 - core index']
  #allocation1 [shape = 'u32[144,128]{1,0:T(1,128)}', space=vmem, size = 0x12000, scoped, tag = 'internal scratch']
  %s0 = inlined_call_operand.hbm [shape: f32[1,16], index: 0, kind: input, shape index: {}]
  %s1 = inlined_call_operand.vmem [shape: f32[1,16], index: 1, kind: input, shape index: {}]
  %s2 = inlined_call_operand.vmem [shape: f32[4,16], index: 2, kind: input, shape index: {}]
  %s3 = inlined_call_operand.vmem [shape: s32[4,16], index: 3, kind: input, shape index: {}]
  %s4 = inlined_call_operand.vmem [shape: f32[1,16], index: 4, kind: input, shape index: {}]
  %s5 = inlined_call_operand.hbm [shape: f32[1,16], index: 5, kind: output, shape index: {}]
  %s6 = sld [smem:[#allocation0]]
  $region34: #{tpu_custom_call.1} parent=0
    _
  %s8 = ssub.s32 1, %s6
  %s9 = scalar_select 0, %s8, %s6
  $region1: #{tpu_custom_call.1} parent=0
    #allocation2 [shape = 'u8[512]{0}', space=vmem, size = 0x400, scoped, tag = 'input window, operand 0, single buffered']
    #allocation3 [shape = 's32[1]{0}', space=sflag, size = 0x4, scoped, tag = 'scoped memory for tpu_custom_call.1']
    #allocation4 [shape = 's32[1]{0}', space=sflag, size = 0x4, scoped, tag = 'scoped memory for tpu_custom_call.1']
    #allocation5 [shape = 'u8[512]{0}', space=vmem, size = 0x400, scoped, tag = 'output window, operand 0, single buffered']
    %10 = vsyncpa [#allocation3], 0
    %11 = vsyncpa [#allocation4], 0
    // Predicated region
    $region2: #{tpu_custom_call.1} parent=1 // pred_check
      _
    $region3: #{tpu_custom_call.1} parent=1 // pred_check_branch
      %13 = sbr.rel (0) target = $region5
    $region4: #{tpu_custom_call.1} parent=1 // pred_region
      %s15 = ssub.s32 16, 16
      %16 = vsyncadd [#allocation3], %s15
      %s18 = sshll.u32 [#allocation2], 4
      %s19 = int_to_ptr.vmem [resolvable:$true] %s18
      %21 = dma.hbm_to_vmem [thread:$0]  %s0, 16, %s19, [#allocation3]
    $region5: #{tpu_custom_call.1} parent=1 // pred_fallthru
      _
    // Predicated region
    $region6: #{tpu_custom_call.1} parent=1 // pred_check
      _
    $region7: #{tpu_custom_call.1} parent=1 // pred_check_branch
      %23 = sbr.rel (0) target = $region9
    $region8: #{tpu_custom_call.1} parent=1 // pred_region
      _
    $region9: #{tpu_custom_call.1} parent=1 // pred_fallthru
      _
    // Predicated region
    $region10: #{tpu_custom_call.1} parent=1 // pred_check
      _
    $region11: #{tpu_custom_call.1} parent=1 // pred_check_branch
      %25 = sbr.rel (0) target = $region13
    $region12: #{tpu_custom_call.1} parent=1 // pred_region
      _
    $region13: #{tpu_custom_call.1} parent=1 // pred_fallthru
      _
    // Predicated region
    $region14: #{tpu_custom_call.1} parent=1 // pred_check
      _
    $region15: #{tpu_custom_call.1} parent=1 // pred_check_branch
      %27 = sbr.rel (0) target = $region17
    $region16: #{tpu_custom_call.1} parent=1 // pred_region
      _
    $region17: #{tpu_custom_call.1} parent=1 // pred_fallthru
      _
    // Predicated region
    $region18: #{tpu_custom_call.1} parent=1 // pred_check
      _
    $region19: #{tpu_custom_call.1} parent=1 // pred_check_branch
      %29 = sbr.rel (0) target = $region21
    $region20: #{tpu_custom_call.1} parent=1 // pred_region
      _
    $region21: #{tpu_custom_call.1} parent=1 // pred_fallthru
      _
    // Predicated region
    $region22: #{tpu_custom_call.1} parent=1 // pred_check
      _
    $region23: #{tpu_custom_call.1} parent=1 // pred_check_branch
      %31 = sbr.rel (0) target = $region25
    $region24: #{tpu_custom_call.1} parent=1 // pred_region
      %32 = dma.done [#allocation3], 16
    $region25: #{tpu_custom_call.1} parent=1 // pred_fallthru
      _
    %v33 = vld [vmem:[#allocation2] sm:$0x1]
    %vm34 = vcmask 122880
    %v35 = vsel %vm34, %v33, 0.0
    %36 = vadd.xlane.f32.xlu0 %v35
    %v37 = vpop.xlane.xlu0 %36
    %v38 = vrot.slane %v37, 4
    %v39 = vadd.f32 %v37, %v38
    %v40 = vrot.slane %v39, 2
    %v41 = vadd.f32 %v39, %v40
    %v42 = vrot.slane %v41, 1
    %v43 = vadd.f32 %v41, %v42
    %s44 = vtos %v43
    %v45 = vrcp.pop 16.0
    %s46 = vtos %v45
    %s47 = smul.f32 %s44, %s46
    %v48 = vlaneseq
    %v49 = vshrl.u32 %v48, 7
    %v50 = vadd.s32 %v49, 8
    %v51 = vld [vmem:[%s3] sm:$0x1]
    %v52 = vld [vmem:[%s2] sm:$0x1]
    %v53 = vlaneseq
    %v54 = vshrl.u32 %v53, 7
    %v55 = vsub.s32 0, %v54
    %v56 = vrot.slane %v51, %v55
    %vm57 = vcmp.eq.s32.totalorder %v56, %v49
    %vm58 = vcmp.eq.s32.totalorder %v56, %v50
    %v59 = vlaneseq
    %v60 = vshrl.u32 %v59, 7
    %v61 = vsub.s32 0, %v60
    %v62 = vrot.slane %v52, %v61
    %v63 = vsel %vm57, %v62, 0.0
    %v64 = vsel %vm58, %v62, 0.0
    %v65 = vadd.f32 %v63, 0.0
    %v66 = vadd.f32 %v64, 0.0
    %v67 = vld [vmem:[%s3 + $0x1] sm:$0x1]
    %v68 = vld [vmem:[%s2 + $0x1] sm:$0x1]
    %v69 = vlaneseq
    %v70 = vshrl.u32 %v69, 7
    %v71 = vsub.s32 0, %v70
    %v72 = vrot.slane %v67, %v71
    %vm73 = vcmp.eq.s32.totalorder %v72, %v49
    %vm74 = vcmp.eq.s32.totalorder %v72, %v50
    %v75 = vlaneseq
    %v76 = vshrl.u32 %v75, 7
    %v77 = vsub.s32 0, %v76
    %v78 = vrot.slane %v68, %v77
    %v79 = vsel %vm73, %v78, 0.0
    %v80 = vsel %vm74, %v78, 0.0
    %v81 = vadd.f32 %v65, %v79
    %v82 = vadd.f32 %v66, %v80
    %v83 = vld [vmem:[%s3 + $0x2] sm:$0x1]
    %v84 = vld [vmem:[%s2 + $0x2] sm:$0x1]
    %v85 = vlaneseq
    %v86 = vshrl.u32 %v85, 7
    %v87 = vsub.s32 0, %v86
    %v88 = vrot.slane %v83, %v87
    %vm89 = vcmp.eq.s32.totalorder %v88, %v49
    %vm90 = vcmp.eq.s32.totalorder %v88, %v50
    %v91 = vlaneseq
    %v92 = vshrl.u32 %v91, 7
    %v93 = vsub.s32 0, %v92
    %v94 = vrot.slane %v84, %v93
    %v95 = vsel %vm89, %v94, 0.0
    %v96 = vsel %vm90, %v94, 0.0
    %v97 = vadd.f32 %v81, %v95
    %v98 = vadd.f32 %v82, %v96
    %v99 = vld [vmem:[%s3 + $0x3] sm:$0x1]
    %v100 = vld [vmem:[%s2 + $0x3] sm:$0x1]
    %v101 = vlaneseq
    %v102 = vshrl.u32 %v101, 7
    %v103 = vsub.s32 0, %v102
    %v104 = vrot.slane %v99, %v103
    %vm105 = vcmp.eq.s32.totalorder %v104, %v49
    %vm106 = vcmp.eq.s32.totalorder %v104, %v50
    %v107 = vlaneseq
    %v108 = vshrl.u32 %v107, 7
    %v109 = vsub.s32 0, %v108
    %v110 = vrot.slane %v100, %v109
    %v111 = vsel %vm105, %v110, 0.0
    %v112 = vsel %vm106, %v110, 0.0
    %v113 = vadd.f32 %v97, %v111
    %v114 = vadd.f32 %v98, %v112
    %v115 = vstv %s47
    %v116 = vsub.f32 %v33, %v115
    %vm117 = vcmask 130048
    %v119 = vsel %vm117, %v116, 0
    %121 = vmatprep.subr.mxu0 0.0
    %122 = vmatpush1.msra.mxu0 %v113
    %123 = vmatprep.subr.mxu0 0.0
    %124 = vmatpush1.msra.mxu0 %v114
    %125 = vmatprep.subr.mxu0 0.0
    %126 = vmatpush1.msra.mxu0 0.0
    %127 = vmatprep.subr.mxu0 0.0
    %128 = vmatpush1.msra.mxu0 0.0
    %129 = vmatprep.subr.mxu0 0.0
    %130 = vmatpush1.msra.mxu0 0.0
    %131 = vmatprep.subr.mxu0 0.0
    %132 = vmatpush1.msra.mxu0 0.0
    %133 = vmatprep.subr.mxu0 0.0
    %134 = vmatpush1.msra.mxu0 0.0
    %135 = vmatprep.subr.mxu0 0.0
    %136 = vmatpush1.msra.mxu0 0.0
    %137 = vmatprep.subr.mxu0 0.0
    %138 = vmatpush1.msra.mxu0 0.0
    %139 = vmatprep.subr.mxu0 0.0
    %140 = vmatpush1.msra.mxu0 0.0
    %141 = vmatprep.subr.mxu0 0.0
    %142 = vmatpush1.msra.mxu0 0.0
    %143 = vmatprep.subr.mxu0 0.0
    %144 = vmatpush1.msra.mxu0 0.0
    %145 = vmatprep.subr.mxu0 0.0
    %146 = vmatpush1.msra.mxu0 0.0
    %147 = vmatprep.subr.mxu0 0.0
    %148 = vmatpush1.msra.mxu0 0.0
    %149 = vmatprep.subr.mxu0 0.0
    %150 = vmatpush1.msra.mxu0 0.0
    %151 = vmatprep.subr.mxu0 0.0
    %152 = vmatpush1.msra.mxu0 0.0
    %153 = vmatprep.subr.mxu0 0.0
    %154 = vmatpush1.msra.mxu0 0.0
    %155 = vmatprep.subr.mxu0 0.0
    %156 = vmatpush1.msra.mxu0 0.0
    %157 = vmatprep.subr.mxu0 0.0
    %158 = vmatpush1.msra.mxu0 0.0
    %159 = vmatprep.subr.mxu0 0.0
    %160 = vmatpush1.msra.mxu0 0.0
    %161 = vmatprep.subr.mxu0 0.0
    %162 = vmatpush1.msra.mxu0 0.0
    %163 = vmatprep.subr.mxu0 0.0
    %164 = vmatpush1.msra.mxu0 0.0
    %165 = vmatprep.subr.mxu0 0.0
    %166 = vmatpush1.msra.mxu0 0.0
    %167 = vmatprep.subr.mxu0 0.0
    %168 = vmatpush1.msra.mxu0 0.0
    %169 = vmatprep.subr.mxu0 0.0
    %170 = vmatpush1.msra.mxu0 0.0
    %171 = vmatprep.subr.mxu0 0.0
    %172 = vmatpush1.msra.mxu0 0.0
    %173 = vmatprep.subr.mxu0 0.0
    %174 = vmatpush1.msra.mxu0 0.0
    %175 = vmatprep.subr.mxu0 0.0
    %176 = vmatpush1.msra.mxu0 0.0
    %177 = vmatprep.subr.mxu0 0.0
    %178 = vmatpush1.msra.mxu0 0.0
    %179 = vmatprep.subr.mxu0 0.0
    %180 = vmatpush1.msra.mxu0 0.0
    %181 = vmatprep.subr.mxu0 0.0
    %182 = vmatpush1.msra.mxu0 0.0
    %183 = vmatprep.subr.mxu0 0.0
    %184 = vmatpush1.msra.mxu0 0.0
    %185 = vmatprep.mubr.f32.mxu0 0.0
    %186 = vmatmul.mubr.f32.gmra.mrb[0].mxu0 %v119
    %v187 = vpop.f32.mrb[0].mxu0
    %v188 = vadd.f32 0.0, %v187
    %v189 = vpop.f32.mrb[0].mxu0
    %190 = vdwg.mxu0
    %v191 = vmul.f32 %v116, %v116
    %v193 = vsel %vm117, %v191, 0
    %195 = vmatprep.subr.mxu0 0.0
    %196 = vmatpush1.msra.mxu0 %v113
    %197 = vmatprep.subr.mxu0 0.0
    %198 = vmatpush1.msra.mxu0 %v114
    %199 = vmatprep.subr.mxu0 0.0
    %200 = vmatpush1.msra.mxu0 0.0
    %201 = vmatprep.subr.mxu0 0.0
    %202 = vmatpush1.msra.mxu0 0.0
    %203 = vmatprep.subr.mxu0 0.0
    %204 = vmatpush1.msra.mxu0 0.0
    %205 = vmatprep.subr.mxu0 0.0
    %206 = vmatpush1.msra.mxu0 0.0
    %207 = vmatprep.subr.mxu0 0.0
    %208 = vmatpush1.msra.mxu0 0.0
    %209 = vmatprep.subr.mxu0 0.0
    %210 = vmatpush1.msra.mxu0 0.0
    %211 = vmatprep.subr.mxu0 0.0
    %212 = vmatpush1.msra.mxu0 0.0
    %213 = vmatprep.subr.mxu0 0.0
    %214 = vmatpush1.msra.mxu0 0.0
    %215 = vmatprep.subr.mxu0 0.0
    %216 = vmatpush1.msra.mxu0 0.0
    %217 = vmatprep.subr.mxu0 0.0
    %218 = vmatpush1.msra.mxu0 0.0
    %219 = vmatprep.subr.mxu0 0.0
    %220 = vmatpush1.msra.mxu0 0.0
    %221 = vmatprep.subr.mxu0 0.0
    %222 = vmatpush1.msra.mxu0 0.0
    %223 = vmatprep.subr.mxu0 0.0
    %224 = vmatpush1.msra.mxu0 0.0
    %225 = vmatprep.subr.mxu0 0.0
    %226 = vmatpush1.msra.mxu0 0.0
    %227 = vmatprep.subr.mxu0 0.0
    %228 = vmatpush1.msra.mxu0 0.0
    %229 = vmatprep.subr.mxu0 0.0
    %230 = vmatpush1.msra.mxu0 0.0
    %231 = vmatprep.subr.mxu0 0.0
    %232 = vmatpush1.msra.mxu0 0.0
    %233 = vmatprep.subr.mxu0 0.0
    %234 = vmatpush1.msra.mxu0 0.0
    %235 = vmatprep.subr.mxu0 0.0
    %236 = vmatpush1.msra.mxu0 0.0
    %237 = vmatprep.subr.mxu0 0.0
    %238 = vmatpush1.msra.mxu0 0.0
    %239 = vmatprep.subr.mxu0 0.0
    %240 = vmatpush1.msra.mxu0 0.0
    %241 = vmatprep.subr.mxu0 0.0
    %242 = vmatpush1.msra.mxu0 0.0
    %243 = vmatprep.subr.mxu0 0.0
    %244 = vmatpush1.msra.mxu0 0.0
    %245 = vmatprep.subr.mxu0 0.0
    %246 = vmatpush1.msra.mxu0 0.0
    %247 = vmatprep.subr.mxu0 0.0
    %248 = vmatpush1.msra.mxu0 0.0
    %249 = vmatprep.subr.mxu0 0.0
    %250 = vmatpush1.msra.mxu0 0.0
    %251 = vmatprep.subr.mxu0 0.0
    %252 = vmatpush1.msra.mxu0 0.0
    %253 = vmatprep.subr.mxu0 0.0
    %254 = vmatpush1.msra.mxu0 0.0
    %255 = vmatprep.subr.mxu0 0.0
    %256 = vmatpush1.msra.mxu0 0.0
    %257 = vmatprep.subr.mxu0 0.0
    %258 = vmatpush1.msra.mxu0 0.0
    %259 = vmatprep.mubr.f32.mxu0 0.0
    %260 = vmatmul.mubr.f32.gmra.mrb[0].mxu0 %v193
    %v261 = vpop.f32.mrb[0].mxu0
    %v262 = vadd.f32 0.0, %v261
    %v263 = vpop.f32.mrb[0].mxu0
    %264 = vdwg.mxu0
    %v265 = vld [vmem:[%s4] sm:$0x1]
    %v266 = vsub.f32 %v265, 1.0
    %v267 = vrcp.pop %v266
    %v268 = vmul.f32 %v262, %v267
    %v269 = vld [vmem:[%s1] sm:$0x1]
    %v270 = vsub.f32 %v269, %v115
    %v271 = vmul.f32 %v270, %v188
    %v272 = vrcp.pop %v268
    %v273 = vmul.f32 %v271, %v272
    %vm274 = vcmp.gt.f32.partialorder %v265, 0.5
    %v275 = vand.u32 2147483647, %v273
    %v276 = vsel %vm274, %v275, 0.0
    %277 = vst.msk [vmem:[#allocation5] sm:$0x1] %vm34, %v276
    // Predicated region
    $region26: #{tpu_custom_call.1} parent=1 // pred_check
      _
    $region27: #{tpu_custom_call.1} parent=1 // pred_check_branch
      %279 = sbr.rel (0) target = $region29
    $region28: #{tpu_custom_call.1} parent=1 // pred_region
      %s281 = ssub.s32 16, 16
      %282 = vsyncadd [#allocation4], %s281
      %s284 = sshll.u32 [#allocation5], 4
      %s285 = int_to_ptr.vmem [resolvable:$true] %s284
      %287 = dma.vmem_to_hbm [thread:$0]  %s285, 16, %s5, [#allocation4]
    $region29: #{tpu_custom_call.1} parent=1 // pred_fallthru
      _
    // Predicated region
    $region30: #{tpu_custom_call.1} parent=1 // pred_check
      _
    $region31: #{tpu_custom_call.1} parent=1 // pred_check_branch
      %289 = sbr.rel (0) target = $region33
    $region32: #{tpu_custom_call.1} parent=1 // pred_region
      %290 = dma.done [#allocation4], 16
    $region33: #{tpu_custom_call.1} parent=1 // pred_fallthru
      _
    %291 = vsyncpa [#allocation3], 1
    %292 = vsyncpa [#allocation4], 1

</llo_original>
